<compile_context>
chip_gen: v7x
topology: tpu7x:2x2x1
jax: 0.10.0
libtpu: 0.0.40
codegen_flags: <defaults>
</compile_context>

<pallas_src>
import functools

import jax
import jax.numpy as jnp
from jax.experimental import pallas as pl
from jax.experimental.pallas import tpu as pltpu

LANE = 128


def _act_quant_kernel(x_ref, o_ref, *, a_bit):
    """Elementwise DoReFa activation quantization on one (block_rows, W) tile."""
    if a_bit == 32:
        # Pure clamp -- exact in the native dtype, no f32 round-trip needed.
        o_ref[...] = jnp.clip(x_ref[...], 0.0, 6.0).astype(o_ref.dtype)
    else:
        n = float(2 ** a_bit)
        x = x_ref[...].astype(jnp.float32)
        xc = jnp.clip(x, 0.0, 1.0)
        q = jnp.clip(jnp.round(xc * n), -n, n - 1.0) * (1.0 / n)  # 1/n exact (pow2)
        o_ref[...] = q.astype(o_ref.dtype)


def _largest_lane_divisor(n_elem, cap=2048):
    """Largest multiple of 128 that divides n_elem exactly (<= cap); 0 if none."""
    best = 0
    w = LANE
    limit = min(n_elem, cap)
    while w <= limit:
        if n_elem % w == 0:
            best = w
        w += LANE
    return best


def activation_quantize_fn(x, a_bit):
    """JAX/Pallas equivalent of the PyTorch activation_quantize_fn.forward."""
    assert a_bit <= 8 or a_bit == 32
    orig_shape = x.shape
    orig_dtype = x.dtype
    n_elem = x.size
    if n_elem == 0:
        return x

    itemsize = jnp.dtype(orig_dtype).itemsize
    # Minimum sublane multiple for this dtype's (sub, 128) register tiling.
    sub = 8 * max(1, 4 // itemsize)          # f32 -> 8, bf16 -> 16, int8 -> 32

    # Lane-dense width chosen from the tensor's own size so no padding is needed
    # in the common case (n_elem divisible by 128).
    W = _largest_lane_divisor(n_elem)
    if W:
        pad = 0
        rows = n_elem // W
    else:
        # Rare ragged case (n_elem not a multiple of 128): pad the flat tensor.
        # TODO(synk): a tiny separate remainder pass would avoid this copy.
        W = LANE
        rows = pl.cdiv(n_elem, W)
        pad = rows * W - n_elem

    # Block rows: ~4 MiB per buffer (2 in + 2 out double-buffered = 16 MiB live,
    # within the explicit 32 MiB VMEM budget below on every generation).  Keep
    # >= 4 grid steps on large tensors so megacore (v7x) can shard the parallel
    # axis, but never shrink a block below ~512 KiB just to manufacture steps.
    max_block_rows = max(sub, ((4 << 20) // (W * itemsize)) // sub * sub)
    min_block_rows = max(sub, ((512 << 10) // (W * itemsize)) // sub * sub)
    block_rows = min(rows, max_block_rows)
    if rows // 4 >= min_block_rows:
        block_rows = min(block_rows,
                         max(min_block_rows, (rows // 4) // sub * sub))

    flat = x.reshape(-1)
    if pad:
        flat = jnp.pad(flat, (0, pad))       # only when n_elem % 128 != 0
    x2d = flat.reshape(rows, W)              # free bitcast when pad == 0

    grid = (pl.cdiv(rows, block_rows),)      # ragged last block is masked by Pallas
    out2d = pl.pallas_call(
        functools.partial(_act_quant_kernel, a_bit=a_bit),
        out_shape=jax.ShapeDtypeStruct((rows, W), orig_dtype),
        grid=grid,
        in_specs=[pl.BlockSpec((block_rows, W), lambda i: (i, 0))],
        out_specs=pl.BlockSpec((block_rows, W), lambda i: (i, 0)),
        compiler_params=pltpu.CompilerParams(
            dimension_semantics=("parallel",),
            vmem_limit_bytes=32 << 20),
    )(x2d)

    if pad:
        return out2d.reshape(-1)[:n_elem].reshape(orig_shape)
    return out2d.reshape(orig_shape)


def _reference(x, a_bit):
    """Pure-JAX reference mirroring the PyTorch forward exactly."""
    if a_bit == 32:
        return jnp.clip(x, 0.0, 6.0)
    n = float(2 ** a_bit)
    xf = x.astype(jnp.float32)
    xc = jnp.clip(xf, 0.0, 1.0)
    out = jnp.clip(jnp.round(xc * n), -n, n - 1.0) / n
    return out.astype(x.dtype)


# TODO(synk): the straight-through-estimator backward of uniform_quantize is a
# gradient rule (jax.custom_vjp), not part of the forward kernel.

if __name__ == "__main__":
    key = jax.random.PRNGKey(0)
    k1, k2 = jax.random.split(key)
    # Activation-style tensors (NCHW), scaled so values exercise every clamp
    # branch (negatives, >1, and >6).
    x_f32 = 4.0 * jax.random.normal(k1, (2, 4, 16, 16), dtype=jnp.float32)
    x_bf16 = (4.0 * jax.random.normal(k2, (2, 8, 32, 32),
                                      dtype=jnp.float32)).astype(jnp.bfloat16)

    ok = True
    for x in (x_f32, x_bf16):
        for a_bit in (1, 2, 4, 8, 32):
            out = jax.block_until_ready(activation_quantize_fn(x, a_bit))
            ref = _reference(x, a_bit)
            if out.dtype != x.dtype or out.shape != x.shape:
                ok = False
                print(f"BAD SHAPE/DTYPE dtype={x.dtype} a_bit={a_bit}")
                continue
            if not bool(jnp.allclose(out.astype(jnp.float32),
                                     ref.astype(jnp.float32),
                                     atol=1e-5, rtol=1e-5)):
                ok = False
                print(f"MISMATCH dtype={x.dtype} a_bit={a_bit}")
    if ok:
        print("KERNEL_OK")
</pallas_src>

<mosaic_0001>
module attributes {stable_mosaic.version = 11 : i64} {
  func.func @_act_quant_kernel(%arg0: i32, %arg1: memref<1x2048xf32, #tpu.memory_space<vmem>>, %arg2: memref<1x2048xf32, #tpu.memory_space<vmem>>) attributes {dimension_semantics = [#tpu.dimension_semantics<parallel>], iteration_bounds = array<i64: 1>, scalar_prefetch = 0 : i64, scratch_operands = 0 : i64, tpu.core_type = #tpu.core_type<tc>, window_params = [{transform_indices = @transform_0, window_bounds = array<i64: 1, 2048>}, {transform_indices = @transform_1, window_bounds = array<i64: 1, 2048>}]} {
    %c0 = arith.constant 0 : index
    %c0_0 = arith.constant 0 : index
    %0 = vector.load %arg1[%c0, %c0_0] : memref<1x2048xf32, #tpu.memory_space<vmem>>, vector<1x2048xf32>
    %cst = arith.constant 0.000000e+00 : f32
    %cst_1 = arith.constant 1.000000e+00 : f32
    %1 = vector.broadcast %cst : f32 to vector<1x2048xf32>
    %2 = arith.maximumf %1, %0 : vector<1x2048xf32>
    %3 = vector.broadcast %cst_1 : f32 to vector<1x2048xf32>
    %4 = arith.minimumf %3, %2 : vector<1x2048xf32>
    %cst_2 = arith.constant 2.000000e+00 : f32
    %5 = vector.broadcast %cst_2 : f32 to vector<1x2048xf32>
    %6 = arith.mulf %4, %5 : vector<1x2048xf32>
    %7 = math.roundeven %6 : vector<1x2048xf32>
    %cst_3 = arith.constant -2.000000e+00 : f32
    %cst_4 = arith.constant 1.000000e+00 : f32
    %8 = vector.broadcast %cst_3 : f32 to vector<1x2048xf32>
    %9 = arith.maximumf %8, %7 : vector<1x2048xf32>
    %10 = vector.broadcast %cst_4 : f32 to vector<1x2048xf32>
    %11 = arith.minimumf %10, %9 : vector<1x2048xf32>
    %cst_5 = arith.constant 5.000000e-01 : f32
    %12 = vector.broadcast %cst_5 : f32 to vector<1x2048xf32>
    %13 = arith.mulf %11, %12 : vector<1x2048xf32>
    %c0_6 = arith.constant 0 : index
    %c0_7 = arith.constant 0 : index
    %14 = vector.load %arg2[%c0_6, %c0_7] : memref<1x2048xf32, #tpu.memory_space<vmem>>, vector<1x2048xf32>
    tpu.vector_store %arg2[%c0_6, %c0_7], %13 {strides = array<i32>} : memref<1x2048xf32, #tpu.memory_space<vmem>>, vector<1x2048xf32>,
    return
  }
  func.func @transform_0(%arg0: i32) -> (i32, i32) {
    %c0_i32 = arith.constant 0 : i32
    %c0_i32_0 = arith.constant 0 : i32
    return %arg0, %c0_i32 : i32, i32
  }
  func.func @transform_1(%arg0: i32) -> (i32, i32) {
    %c0_i32 = arith.constant 0 : i32
    %c0_i32_0 = arith.constant 0 : i32
    return %arg0, %c0_i32 : i32, i32
  }
}

</mosaic_0001>

<llo_original>
// kernel: tpu_custom_call.1
$region0: #{tpu_custom_call.1}
  #allocation0 [shape = 'u32[]', space=smem, size = 0x4, offset = 0x4, fixed_abs, tag = 'smem constant byte address 0x4 - core index']
  #allocation1 [shape = 'u32[144,128]{1,0:T(1,128)}', space=vmem, size = 0x12000, scoped, tag = 'internal scratch']
  %s0 = inlined_call_operand.hbm [shape: f32[1,2048], index: 0, kind: input, shape index: {}]
  %s1 = inlined_call_operand.hbm [shape: f32[1,2048], index: 1, kind: output, shape index: {}]
  %s2 = sld [smem:[#allocation0]]
  $region18: #{tpu_custom_call.1} parent=0
    _
  %s4 = ssub.s32 1, %s2
  %s5 = scalar_select 0, %s4, %s2
  $region1: #{tpu_custom_call.1} parent=0
    #allocation2 [shape = 'u8[8192]{0}', space=vmem, size = 0x2000, scoped, tag = 'input window, operand 0, single buffered']
    #allocation3 [shape = 's32[1]{0}', space=sflag, size = 0x4, scoped, tag = 'scoped memory for tpu_custom_call.1']
    #allocation4 [shape = 's32[1]{0}', space=sflag, size = 0x4, scoped, tag = 'scoped memory for tpu_custom_call.1']
    #allocation5 [shape = 'u8[8192]{0}', space=vmem, size = 0x2000, scoped, tag = 'output window, operand 0, single buffered']
    %6 = vsyncpa [#allocation3], 0
    %7 = vsyncpa [#allocation4], 0
    // Predicated region
    $region2: #{tpu_custom_call.1} parent=1 // pred_check
      _
    $region3: #{tpu_custom_call.1} parent=1 // pred_check_branch
      %9 = sbr.rel (0) target = $region5
    $region4: #{tpu_custom_call.1} parent=1 // pred_region
      %s11 = ssub.s32 256, 256
      %12 = vsyncadd [#allocation3], %s11
      %s14 = sshll.u32 [#allocation2], 4
      %s15 = int_to_ptr.vmem [resolvable:$true] %s14
      %17 = dma.hbm_to_vmem [thread:$0]  %s0, 256, %s15, [#allocation3]
    $region5: #{tpu_custom_call.1} parent=1 // pred_fallthru
      _
    // Predicated region
    $region6: #{tpu_custom_call.1} parent=1 // pred_check
      _
    $region7: #{tpu_custom_call.1} parent=1 // pred_check_branch
      %19 = sbr.rel (0) target = $region9
    $region8: #{tpu_custom_call.1} parent=1 // pred_region
      %20 = dma.done [#allocation3], 256
    $region9: #{tpu_custom_call.1} parent=1 // pred_fallthru
      _
    %v21 = vld [vmem:[#allocation2] sm:$0xff]
    %v22 = vld [vmem:[#allocation2 + $0x8] sm:$0xff]
    %v23 = vmax.f32 %v21, 0.0
    %v24 = vmax.f32 %v22, 0.0
    %v25 = vmin.f32 %v23, 1.0
    %v26 = vmin.f32 %v24, 1.0
    %v27 = vmul.f32 %v25, 2.0
    %v28 = vmul.f32 %v26, 2.0
    %v29 = vround.ne.pseudo %v27
    %v30 = vround.ne.pseudo %v28
    %v31 = vmax.f32 %v29, -2.0
    %v32 = vmax.f32 %v30, -2.0
    %v33 = vmin.f32 %v31, 1.0
    %v34 = vmin.f32 %v32, 1.0
    %v35 = vmul.f32 %v33, 0.5
    %v36 = vmul.f32 %v34, 0.5
    %37 = vst [vmem:[#allocation5] sm:$0xff] %v35
    %38 = vst [vmem:[#allocation5 + $0x8] sm:$0xff] %v36
    // Predicated region
    $region10: #{tpu_custom_call.1} parent=1 // pred_check
      _
    $region11: #{tpu_custom_call.1} parent=1 // pred_check_branch
      %40 = sbr.rel (0) target = $region13
    $region12: #{tpu_custom_call.1} parent=1 // pred_region
      %s42 = ssub.s32 256, 256
      %43 = vsyncadd [#allocation4], %s42
      %s45 = sshll.u32 [#allocation5], 4
      %s46 = int_to_ptr.vmem [resolvable:$true] %s45
      %48 = dma.vmem_to_hbm [thread:$0]  %s46, 256, %s1, [#allocation4]
    $region13: #{tpu_custom_call.1} parent=1 // pred_fallthru
      _
    // Predicated region
    $region14: #{tpu_custom_call.1} parent=1 // pred_check
      _
    $region15: #{tpu_custom_call.1} parent=1 // pred_check_branch
      %50 = sbr.rel (0) target = $region17
    $region16: #{tpu_custom_call.1} parent=1 // pred_region
      %51 = dma.done [#allocation4], 256
    $region17: #{tpu_custom_call.1} parent=1 // pred_fallthru
      _
    %52 = vsyncpa [#allocation3], 1
    %53 = vsyncpa [#allocation4], 1

</llo_original>
